<compile_context>
chip_gen: v7x
topology: tpu7x:2x2x1
jax: 0.10.0
libtpu: 0.0.40
codegen_flags: <defaults>
</compile_context>

<pallas_src>
import jax
import jax.numpy as jnp
from jax.experimental import pallas as pl
from jax.experimental.pallas import tpu as pltpu

BN_EPS = 1e-5


# ----------------------------------------------------------------------------
# Pallas kernel 1: one deep MXU matmul per N-tile + per-tile BN partial stats.
#   x_ref:     [TN, K*Cin]  bf16
#   w_ref:     [K*Cin, CP]  bf16 (resident across tiles, CP = 128-padded Cout)
#   y_ref:     [TN, Cout]   bf16 (only real channels hit HBM)
#   stats_ref: [1, 2, CP]   f32  (per-tile sum / sum-of-squares from f32 acc)
# ----------------------------------------------------------------------------
def _deconv_matmul_kernel(x_ref, w_ref, y_ref, stats_ref):
    y = jnp.dot(x_ref[...], w_ref[...], preferred_element_type=jnp.float32)
    cout = y_ref.shape[-1]
    y_ref[...] = y[:, :cout].astype(y_ref.dtype)
    stats_ref[0, 0:1, :] = jnp.sum(y, axis=0, keepdims=True)
    stats_ref[0, 1:2, :] = jnp.sum(y * y, axis=0, keepdims=True)


# ----------------------------------------------------------------------------
# Pallas kernel 2: normalize + affine + ReLU (global stats folded to scale/shift)
# ----------------------------------------------------------------------------
def _bn_relu_kernel(y_ref, scale_ref, shift_ref, o_ref):
    y = y_ref[...].astype(jnp.float32)
    o_ref[...] = jnp.maximum(y * scale_ref[...] + shift_ref[...], 0.0)


# ----------------------------------------------------------------------------
# Wrapper
# ----------------------------------------------------------------------------
def basic_deconvolution_block(feats, nbr_idx, weight, gamma, beta, *, n_tile=1024):
    """feats: [N, Cin], nbr_idx: [K, N] (-1 = miss), weight: [K, Cin, Cout],
    gamma/beta: [Cout].  Returns [N, Cout] f32."""
    N, Cin = feats.shape
    K, _, Cout = weight.shape
    KC = K * Cin

    # Lane-dense MXU output width in VMEM (only Cout columns hit HBM).
    CP = ((Cout + 127) // 128) * 128

    # N tiling: multiples of 16 sublanes (bf16 packing); even tile count when
    # >1 so the "parallel" axis splits evenly across v7x's two TensorCores.
    n_tile = max(16, min(n_tile, ((N + 15) // 16) * 16))
    n_tile = ((n_tile + 15) // 16) * 16
    num_tiles = (N + n_tile - 1) // n_tile
    if num_tiles > 1 and num_tiles % 2 == 1:
        num_tiles += 1
    Np = num_tiles * n_tile

    # --- XLA-side neighbor gather, fully in bf16 ------------------------------
    # TODO(synk): fuse this into pass 1 (VMEM-resident feats + SMEM indices).
    feats_bf = feats.astype(jnp.bfloat16)
    idx = nbr_idx.T                                               # [N, K]
    valid = idx >= 0
    safe = jnp.maximum(idx, 0)
    g = jnp.take(feats_bf, safe.reshape(-1), axis=0).reshape(N, K, Cin)
    g = jnp.where(valid[..., None], g, jnp.bfloat16(0))
    x = g.reshape(N, KC)
    x = jnp.pad(x, ((0, Np - N), (0, 0)))                         # bf16 [Np, KC]

    # conv weight -> [K*Cin, CP] bf16 (zero-padded channels contribute 0)
    w = jnp.pad(weight.reshape(KC, Cout).astype(jnp.bfloat16),
                ((0, 0), (0, CP - Cout)))

    # Per-generation-safe VMEM budget: resident weight + double-buffered x/y
    # tiles + stats + accumulator headroom, capped at 48 MiB (fits v7x's
    # 64 MiB physical VMEM; raise toward 64-96 MiB on v5e/v6e for large KC).
    tile_bytes = (KC * CP * 2                  # resident weight
                  + 2 * n_tile * KC * 2        # double-buffered x tiles
                  + 2 * n_tile * Cout * 2      # double-buffered y tiles
                  + 2 * 2 * CP * 4             # stats blocks
                  + n_tile * CP * 4)           # f32 accumulator headroom
    vmem_limit = int(min(max(32 * 1024 * 1024, 2 * tile_bytes), 48 * 1024 * 1024))

    # ---- pass 1: deep matmul + per-tile partial BN stats ---------------------
    y, stats = pl.pallas_call(
        _deconv_matmul_kernel,
        out_shape=(
            jax.ShapeDtypeStruct((Np, Cout), jnp.bfloat16),
            jax.ShapeDtypeStruct((num_tiles, 2, CP), jnp.float32),
        ),
        grid_spec=pltpu.PrefetchScalarGridSpec(
            num_scalar_prefetch=0,
            grid=(num_tiles,),
            in_specs=[
                pl.BlockSpec((n_tile, KC), lambda i: (i, 0)),
                pl.BlockSpec((KC, CP), lambda i: (0, 0)),       # weight resident
            ],
            out_specs=[
                pl.BlockSpec((n_tile, Cout), lambda i: (i, 0)),  # real channels only
                pl.BlockSpec((1, 2, CP), lambda i: (i, 0, 0)),
            ],
        ),
        compiler_params=pltpu.CompilerParams(
            dimension_semantics=("parallel",),
            vmem_limit_bytes=vmem_limit,
        ),
    )(x, w)

    # ---- global BN statistics (training-mode, biased variance); tiny [Cout] math
    tot = jnp.sum(stats, axis=0)                          # [2, CP]
    mean = tot[0, :Cout] / N                              # zero-pad rows contribute 0
    var = jnp.maximum(tot[1, :Cout] / N - mean * mean, 0.0)
    inv = jax.lax.rsqrt(var + BN_EPS)
    gamma_f = gamma.astype(jnp.float32)
    beta_f = beta.astype(jnp.float32)
    scale = (gamma_f * inv).reshape(1, Cout)
    shift = (beta_f - mean * gamma_f * inv).reshape(1, Cout)

    # ---- pass 2: normalize + affine + ReLU (fully parallel over tiles) -------
    out = pl.pallas_call(
        _bn_relu_kernel,
        out_shape=jax.ShapeDtypeStruct((Np, Cout), jnp.float32),
        grid_spec=pltpu.PrefetchScalarGridSpec(
            num_scalar_prefetch=0,
            grid=(num_tiles,),
            in_specs=[
                pl.BlockSpec((n_tile, Cout), lambda i: (i, 0)),
                pl.BlockSpec((1, Cout), lambda i: (0, 0)),      # scale resident
                pl.BlockSpec((1, Cout), lambda i: (0, 0)),      # shift resident
            ],
            out_specs=pl.BlockSpec((n_tile, Cout), lambda i: (i, 0)),
        ),
        compiler_params=pltpu.CompilerParams(
            dimension_semantics=("parallel",),
        ),
    )(y, scale, shift)

    return out[:N]


# ----------------------------------------------------------------------------
# JAX glue: kernel offsets, coordinate hash (dense LUT), neighbor map
# ----------------------------------------------------------------------------
def build_kernel_offsets(ks):
    r = jnp.arange(ks, dtype=jnp.int32) - (ks // 2)
    ox, oy, oz = jnp.meshgrid(r, r, r, indexing="ij")
    return jnp.stack([ox.ravel(), oy.ravel(), oz.ravel()], axis=-1)  # [K, 3]


def build_neighbor_map(coords, offsets, batch_size, grid_size):
    """coords: [N,4] int32 (b, x, y, z).  Returns nbr index [K, N], -1 = miss."""
    N = coords.shape[0]
    D = grid_size
    lin = ((coords[:, 0] * D + coords[:, 1]) * D + coords[:, 2]) * D + coords[:, 3]
    lut = jnp.full((batch_size * D * D * D,), -1, dtype=jnp.int32)
    lut = lut.at[lin].set(jnp.arange(N, dtype=jnp.int32))

    # For a symmetric offset set the transposed-conv offset mirroring is a pure
    # permutation of the (synthetic) weight index, absorbed into the init.
    nb = coords[None, :, 1:] + offsets[:, None, :]                 # [K, N, 3]
    in_bounds = jnp.all((nb >= 0) & (nb < D), axis=-1)             # [K, N]
    nbc = jnp.clip(nb, 0, D - 1)
    lin_nb = (
        (coords[None, :, 0] * D + nbc[..., 0]) * D + nbc[..., 1]
    ) * D + nbc[..., 2]
    return jnp.where(in_bounds, lut[lin_nb], -1)                   # [K, N]


# ----------------------------------------------------------------------------
# Demo
# ----------------------------------------------------------------------------
if __name__ == "__main__":
    key = jax.random.PRNGKey(0)
    k_coord, k_feat, k_w, k_g, k_b = jax.random.split(key, 5)

    B = 2          # batches in the sparse tensor
    D = 8          # voxel grid extent per axis
    N = 256        # number of active (sparse) points (2 N-tiles of 128)
    Cin = 16
    Cout = 32
    ks = 3
    K = ks ** 3

    # unique random voxel coordinates (b, x, y, z)
    lin_all = jax.random.permutation(k_coord, B * D * D * D)[:N].astype(jnp.int32)
    b = lin_all // (D * D * D)
    rem = lin_all % (D * D * D)
    x = rem // (D * D)
    y = (rem // D) % D
    z = rem % D
    coords = jnp.stack([b, x, y, z], axis=-1)                      # [N, 4]

    feats = jax.random.normal(k_feat, (N, Cin), dtype=jnp.float32)  # SparseTensor.F

    # synthetic parameters (spnn.Conv3d weight [K, Cin, Cout], BN affine)
    weight = jax.random.normal(k_w, (K, Cin, Cout), dtype=jnp.float32) * (
        1.0 / jnp.sqrt(K * Cin)
    )
    gamma = 1.0 + 0.1 * jax.random.normal(k_g, (Cout,), dtype=jnp.float32)
    beta = 0.1 * jax.random.normal(k_b, (Cout,), dtype=jnp.float32)

    offsets = build_kernel_offsets(ks)
    nbr_idx = build_neighbor_map(coords, offsets, B, D)            # [K, N]

    out = basic_deconvolution_block(
        feats, nbr_idx, weight, gamma, beta, n_tile=128
    )                                                              # [N, Cout]
    jax.block_until_ready(out)

    # pure-JAX reference mirroring the kernel numerics (bf16 MXU inputs, f32
    # stats from the f32 matmul, bf16 round-trip of the intermediate y)
    idx = nbr_idx.T
    valid = idx >= 0
    safe = jnp.maximum(idx, 0)
    g = jnp.take(feats.astype(jnp.bfloat16), safe.reshape(-1), axis=0)
    g = g.reshape(N, K, Cin)
    g = jnp.where(valid[..., None], g, jnp.bfloat16(0))
    x_flat = g.reshape(N, K * Cin)
    w_flat = weight.reshape(K * Cin, Cout).astype(jnp.bfloat16)
    y_f32 = jnp.dot(x_flat, w_flat, preferred_element_type=jnp.float32)
    mean = jnp.mean(y_f32, axis=0, keepdims=True)
    var = jnp.maximum(jnp.mean(y_f32 * y_f32, axis=0, keepdims=True) - mean * mean, 0.0)
    inv = jax.lax.rsqrt(var + BN_EPS)
    y_bf = y_f32.astype(jnp.bfloat16).astype(jnp.float32)
    ref = jnp.maximum(y_bf * (gamma * inv) + (beta - mean * gamma * inv), 0.0)

    err = float(jnp.max(jnp.abs(out - ref)))
    assert jnp.allclose(out, ref, atol=2e-2, rtol=2e-2), err

    print("KERNEL_OK")
</pallas_src>

<mosaic_0001>
module attributes {stable_mosaic.version = 11 : i64} {
  func.func @_deconv_matmul_kernel(%arg0: i32, %arg1: memref<128x432xbf16, #tpu.memory_space<vmem>>, %arg2: memref<432x128xbf16, #tpu.memory_space<vmem>>, %arg3: memref<128x32xbf16, #tpu.memory_space<vmem>>, %arg4: memref<1x2x128xf32, #tpu.memory_space<vmem>>) attributes {dimension_semantics = [#tpu.dimension_semantics<parallel>], iteration_bounds = array<i64: 2>, scalar_prefetch = 0 : i64, scratch_operands = 0 : i64, tpu.core_type = #tpu.core_type<tc>, window_params = [{transform_indices = @transform_0, window_bounds = array<i64: 128, 432>}, {pipeline_mode = #tpu.pipeline_mode<synchronous>, transform_indices = @transform_1, window_bounds = array<i64: 432, 128>}, {transform_indices = @transform_2, window_bounds = array<i64: 128, 32>}, {transform_indices = @transform_3, window_bounds = array<i64: 1, 2, 128>}]} {
    %c0 = arith.constant 0 : index
    %c0_0 = arith.constant 0 : index
    %0 = vector.load %arg1[%c0, %c0_0] : memref<128x432xbf16, #tpu.memory_space<vmem>>, vector<128x432xbf16>
    %c0_1 = arith.constant 0 : index
    %c0_2 = arith.constant 0 : index
    %1 = vector.load %arg2[%c0_1, %c0_2] : memref<432x128xbf16, #tpu.memory_space<vmem>>, vector<432x128xbf16>
    %cst = arith.constant dense<0.000000e+00> : vector<128x128xf32>
    %2 = tpu.matmul %0, %1, %cst {dimension_numbers = #tpu.dot_dimension_numbers<[1], [0], [0], [1], [0, 0, 1, 1], [], []>} : vector<128x432xbf16>, vector<432x128xbf16>, vector<128x128xf32> -> vector<128x128xf32>
    %3 = vector.extract_strided_slice %2 {offsets = [0, 0], sizes = [128, 32], strides = [1, 1]} : vector<128x128xf32> to vector<128x32xf32>
    %4 = arith.truncf %3 : vector<128x32xf32> to vector<128x32xbf16>
    %c0_3 = arith.constant 0 : index
    %c0_4 = arith.constant 0 : index
    %5 = vector.load %arg3[%c0_3, %c0_4] : memref<128x32xbf16, #tpu.memory_space<vmem>>, vector<128x32xbf16>
    tpu.vector_store %arg3[%c0_3, %c0_4], %4 {strides = array<i32>} : memref<128x32xbf16, #tpu.memory_space<vmem>>, vector<128x32xbf16>,
    %cst_5 = arith.constant dense<0.000000e+00> : vector<128xf32>
    %6 = vector.multi_reduction <add>, %2, %cst_5 [0] : vector<128x128xf32> to vector<128xf32>
    %7 = vector.shape_cast %6 : vector<128xf32> to vector<1x128xf32>
    %c0_6 = arith.constant 0 : index
    %c0_7 = arith.constant 0 : index
    %c0_8 = arith.constant 0 : index
    %8 = vector.load %arg4[%c0_6, %c0_7, %c0_8] : memref<1x2x128xf32, #tpu.memory_space<vmem>>, vector<1x1x128xf32>
    %9 = vector.shape_cast %8 : vector<1x1x128xf32> to vector<1x128xf32>
    %10 = vector.shape_cast %7 : vector<1x128xf32> to vector<1x1x128xf32>
    tpu.vector_store %arg4[%c0_6, %c0_7, %c0_8], %10 {strides = array<i32>} : memref<1x2x128xf32, #tpu.memory_space<vmem>>, vector<1x1x128xf32>,
    %11 = arith.mulf %2, %2 : vector<128x128xf32>
    %cst_9 = arith.constant dense<0.000000e+00> : vector<128xf32>
    %12 = vector.multi_reduction <add>, %11, %cst_9 [0] : vector<128x128xf32> to vector<128xf32>
    %13 = vector.shape_cast %12 : vector<128xf32> to vector<1x128xf32>
    %c0_10 = arith.constant 0 : index
    %c1 = arith.constant 1 : index
    %c0_11 = arith.constant 0 : index
    %14 = vector.load %arg4[%c0_10, %c1, %c0_11] : memref<1x2x128xf32, #tpu.memory_space<vmem>>, vector<1x1x128xf32>
    %15 = vector.shape_cast %14 : vector<1x1x128xf32> to vector<1x128xf32>
    %16 = vector.shape_cast %13 : vector<1x128xf32> to vector<1x1x128xf32>
    tpu.vector_store %arg4[%c0_10, %c1, %c0_11], %16 {strides = array<i32>} : memref<1x2x128xf32, #tpu.memory_space<vmem>>, vector<1x1x128xf32>,
    return
  }
  func.func @transform_0(%arg0: i32) -> (i32, i32) {
    %c0_i32 = arith.constant 0 : i32
    %c0_i32_0 = arith.constant 0 : i32
    return %arg0, %c0_i32 : i32, i32
  }
  func.func @transform_1(%arg0: i32) -> (i32, i32) {
    %c0_i32 = arith.constant 0 : i32
    %c0_i32_0 = arith.constant 0 : i32
    %c0_i32_1 = arith.constant 0 : i32
    return %c0_i32, %c0_i32_0 : i32, i32
  }
  func.func @transform_2(%arg0: i32) -> (i32, i32) {
    %c0_i32 = arith.constant 0 : i32
    %c0_i32_0 = arith.constant 0 : i32
    return %arg0, %c0_i32 : i32, i32
  }
  func.func @transform_3(%arg0: i32) -> (i32, i32, i32) {
    %c0_i32 = arith.constant 0 : i32
    %c0_i32_0 = arith.constant 0 : i32
    %c0_i32_1 = arith.constant 0 : i32
    return %arg0, %c0_i32, %c0_i32_0 : i32, i32, i32
  }
}

</mosaic_0001>

<llo_original>
// kernel: tpu_custom_call.1
$region0: #{tpu_custom_call.1}
  #allocation0 [shape = 'u32[]', space=smem, size = 0x4, offset = 0x4, fixed_abs, tag = 'smem constant byte address 0x4 - core index']
  #allocation1 [shape = 'u32[144,128]{1,0:T(1,128)}', space=vmem, size = 0x12000, scoped, tag = 'internal scratch']
  %s0 = inlined_call_operand.vmem [shape: bf16[256,432], index: 0, kind: input, shape index: {}]
  %s1 = inlined_call_operand.vmem [shape: bf16[432,128], index: 1, kind: input, shape index: {}]
  %s2 = inlined_call_operand.vmem [shape: bf16[256,32], index: 2, kind: output, shape index: {0}]
  %s3 = inlined_call_operand.hbm [shape: f32[2,2,128], index: 3, kind: output, shape index: {1}]
  %4 = xla_tuple %s2, %s3
  %s5 = sld [smem:[#allocation0]]
  $region49: #{tpu_custom_call.1} parent=0
    _
  %s7 = ssub.s32 1, %s5
  %s8 = scalar_select 0, %s7, %s5
  $region1: #{tpu_custom_call.1} parent=0
    #allocation2 [shape = 'u8[2048]{0}', space=vmem, size = 0x800, scoped, tag = 'output window, operand 1']
    #allocation3 [shape = 's32[2]{0}', space=sflag, size = 0x8, scoped, tag = 'scoped memory for tpu_custom_call.1']
    %9 = vsyncpa [#allocation3], 0
    %s10 = scalar_lea.sflag [#allocation3], 1
    %11 = vsyncpa %s10, 0
    loop: start=0, step=1, limit=4
    $region2: #{tpu_custom_call.1} parent=1 // loop_pre_header
      _
    $region3: #{tpu_custom_call.1} parent=1 // loop_header
      %s13 = sphi 0, %s17
      %p14 = scmp.ge.s32.totalorder %s13, 4
      %s23 = sphi 0, %s25
      %s26 = sphi 0, %s23
      %s27 = sphi 0, %s26
      %s43 = sphi 0, %s27
      %s47 = sphi 0, %s47
      %s49 = sphi 0, %s47
      %s50 = sphi 0, %s49
      %s64 = sphi 0, %s50
      %s70 = sphi 0, %s72
      %s73 = sphi 0, %s70
      %s74 = sphi 0, %s73
      %s90 = sphi 0, %s74
      %s96 = sphi 0, %s98
      %s99 = sphi 0, %s96
      %s100 = sphi 0, %s99
      %s116 = sphi 0, %s100
    $region4: #{tpu_custom_call.1} parent=1 // loop_header_branch
      %16 = sbr.rel (%p14) target = $region8
    $region5: #{tpu_custom_call.1} parent=1 // loop_body
      %s18 = ssub.s32 %s13, 1
      %s19 = ssub.s32 %s13, 2
      %s20 = sadd.s32 %s13, 1
      %s21 = ssub.s32 %s13, %s20
      %p22 = scmp.eq.s32.totalorder %s21, 0
      %s24 = sadd.s32 %s23, 1
      %s25 = scalar_select %p22, %s23, %s24
      %p28 = pneg %p22
      %p29 = scmp.eq.s32.totalorder %s13, 1
      %p30 = por %p28, %p29
      %p31 = scmp.ne.s32.totalorder %s23, %s26
      %p32 = scmp.eq.s32.totalorder %s13, 0
      %p33 = por %p31, %p32
      %p34 = scmp.ne.s32.totalorder %s23, %s26
      %p35 = scmp.eq.s32.totalorder %s18, 1
      %p36 = por %p34, %p35
      %p37 = scmp.ne.s32.totalorder %s26, %s27
      %p38 = scmp.eq.s32.totalorder %s18, 0
      %p39 = por %p37, %p38
      %p40 = scmp.ne.s32.totalorder %s26, %s27
      %p41 = scmp.eq.s32.totalorder %s19, 1
      %p42 = por %p40, %p41
      %p44 = scmp.ne.s32.totalorder %s27, %s43
      %p45 = scmp.eq.s32.totalorder %s19, 0
      %p46 = por %p44, %p45
      %s48 = sadd.s32 %s47, 1
      %p51 = scmp.eq.s32.totalorder %s13, 1
      %p52 = scmp.ne.s32.totalorder %s47, %s49
      %p53 = scmp.eq.s32.totalorder %s13, 0
      %p54 = por %p52, %p53
      %p55 = scmp.ne.s32.totalorder %s47, %s49
      %p56 = scmp.eq.s32.totalorder %s18, 1
      %p57 = por %p55, %p56
      %p58 = scmp.ne.s32.totalorder %s49, %s50
      %p59 = scmp.eq.s32.totalorder %s18, 0
      %p60 = por %p58, %p59
      %p61 = scmp.ne.s32.totalorder %s49, %s50
      %p62 = scmp.eq.s32.totalorder %s19, 1
      %p63 = por %p61, %p62
      %p65 = scmp.ne.s32.totalorder %s50, %s64
      %p66 = scmp.eq.s32.totalorder %s19, 0
      %p67 = por %p65, %p66
      %s68 = ssub.s32 %s13, %s20
      %p69 = scmp.eq.s32.totalorder %s68, 0
      %s71 = sadd.s32 %s70, 1
      %s72 = scalar_select %p69, %s70, %s71
      %p75 = pneg %p69
      %p76 = scmp.eq.s32.totalorder %s13, 1
      %p77 = por %p75, %p76
      %p78 = scmp.ne.s32.totalorder %s70, %s73
      %p79 = scmp.eq.s32.totalorder %s13, 0
      %p80 = por %p78, %p79
      %p81 = scmp.ne.s32.totalorder %s70, %s73
      %p82 = scmp.eq.s32.totalorder %s18, 1
      %p83 = por %p81, %p82
      %p84 = scmp.ne.s32.totalorder %s73, %s74
      %p85 = scmp.eq.s32.totalorder %s18, 0
      %p86 = por %p84, %p85
      %p87 = scmp.ne.s32.totalorder %s73, %s74
      %p88 = scmp.eq.s32.totalorder %s19, 1
      %p89 = por %p87, %p88
      %p91 = scmp.ne.s32.totalorder %s74, %s90
      %p92 = scmp.eq.s32.totalorder %s19, 0
      %p93 = por %p91, %p92
      %s94 = ssub.s32 %s13, %s20
      %p95 = scmp.eq.s32.totalorder %s94, 0
      %s97 = sadd.s32 %s96, 1
      %s98 = scalar_select %p95, %s96, %s97
      %p101 = pneg %p95
      %p102 = scmp.eq.s32.totalorder %s13, 1
      %p103 = por %p101, %p102
      %p104 = scmp.ne.s32.totalorder %s96, %s99
      %p105 = scmp.eq.s32.totalorder %s13, 0
      %p106 = por %p104, %p105
      %p107 = scmp.ne.s32.totalorder %s96, %s99
      %p108 = scmp.eq.s32.totalorder %s18, 1
      %p109 = por %p107, %p108
      %p110 = scmp.ne.s32.totalorder %s99, %s100
      %p111 = scmp.eq.s32.totalorder %s18, 0
      %p112 = por %p110, %p111
      %p113 = scmp.ne.s32.totalorder %s99, %s100
      %p114 = scmp.eq.s32.totalorder %s19, 1
      %p115 = por %p113, %p114
      %p117 = scmp.ne.s32.totalorder %s100, %s116
      %p118 = scmp.eq.s32.totalorder %s19, 0
      %p119 = por %p117, %p118
      %p120 = scmp.le.s32.totalorder 1, %s13
      %p121 = scmp.lt.s32.totalorder %s13, 3
      %p122 = pnand %p120, %p121
      %p123 = pneg %p122
      // Predicated region
      $region9: #{tpu_custom_call.1} parent=5 // pred_check
        _
      $region10: #{tpu_custom_call.1} parent=5 // pred_check_branch
        %125 = sbr.rel (%p122) target = $region12
      $region11: #{tpu_custom_call.1} parent=5 // pred_region
        %s126 = ssub.s32 %s13, 1
        // Predicated region
        $region13: #{tpu_custom_call.1} parent=11 // pred_check
          %p127 = pneg %p60
        $region14: #{tpu_custom_call.1} parent=11 // pred_check_branch
          %129 = sbr.rel (%p127) target = $region16
        $region15: #{tpu_custom_call.1} parent=11 // pred_region
          _
        $region16: #{tpu_custom_call.1} parent=11 // pred_fallthru
          _
      $region12: #{tpu_custom_call.1} parent=5 // pred_fallthru
        _
      %p130 = scmp.lt.s32.totalorder %s13, 2
      // Predicated region
      $region17: #{tpu_custom_call.1} parent=5 // pred_check
        %p131 = pneg %p130
      $region18: #{tpu_custom_call.1} parent=5 // pred_check_branch
        %133 = sbr.rel (%p131) target = $region20
      $region19: #{tpu_custom_call.1} parent=5 // pred_region
        // Predicated region
        $region21: #{tpu_custom_call.1} parent=19 // pred_check
          %p134 = pneg %p33
        $region22: #{tpu_custom_call.1} parent=19 // pred_check_branch
          %136 = sbr.rel (%p134) target = $region24
        $region23: #{tpu_custom_call.1} parent=19 // pred_region
          %s137 = smul.u32 16, %s13
          %p138 = scmp.lt.s32.totalorder %s137, 31
          %s139 = scalar_select %p138, %s137, 31
          %s140 = smul.addr %s139, 4
          %s141 = smul.addr %s140, 4
          %s142 = scalar_lea.vmem %s0, %s141
          %s143 = smul.u32 16, %s13
        $region24: #{tpu_custom_call.1} parent=19 // pred_fallthru
          _
      $region20: #{tpu_custom_call.1} parent=5 // pred_fallthru
        _
      %p144 = scmp.le.s32.totalorder 1, %s13
      %p145 = scmp.lt.s32.totalorder %s13, 3
      %p146 = pnand %p144, %p145
      %p147 = pneg %p146
      // Predicated region
      $region25: #{tpu_custom_call.1} parent=5 // pred_check
        _
      $region26: #{tpu_custom_call.1} parent=5 // pred_check_branch
        %149 = sbr.rel (%p146) target = $region28
      $region27: #{tpu_custom_call.1} parent=5 // pred_region
        %s150 = ssub.s32 %s13, 1
        %s151 = smul.u32 16, %s18
        %p152 = scmp.lt.s32.totalorder %s151, 31
        %s153 = scalar_select %p152, %s151, 31
        %s154 = smul.addr %s153, 4
        %s155 = smul.addr %s154, 4
        %s156 = scalar_lea.vmem %s0, %s155
        %p157 = pneg %p39
        %p158 = pneg %p36
        %p159 = pneg %p60
        %p160 = pneg %p57
        %p161 = pneg %p86
        %p162 = pneg %p83
        %s163 = smul.u32 16, %s18
        %p164 = scmp.lt.s32.totalorder %s163, 31
        %s165 = scalar_select %p164, %s163, 31
        %s166 = smul.addr %s165, 4
        %s167 = scalar_lea.vmem %s2, %s166
        %p168 = pneg %p112
        %p169 = pneg %p109
        %s170 = sand.u32 %s99, 1
        %s171 = scalar_lea.sflag [#allocation3], %s170
        %s172 = sand.u32 %s99, 1
        %s173 = smul.addr %s172, 2
        %s174 = scalar_lea.vmem [#allocation2], %s173
        %s175 = smul.u32 16, %s18
        %p176 = scmp.lt.s32.totalorder %s175, 31
        %s177 = scalar_select %p176, %s175, 31
        %s178 = smul.addr %s177, 4
        %s179 = smul.addr %s178, 4
        %s180 = scalar_lea.vmem %s0, %s179
        %s181 = smul.u32 16, %s18
        %s182 = smul.u32 16, %s18
        %p183 = scmp.lt.s32.totalorder %s182, 31
        %s184 = scalar_select %p183, %s182, 31
        %s185 = smul.addr %s184, 4
        %s186 = scalar_lea.vmem %s2, %s185
        %s187 = smul.u32 16, %s18
        %v189 = vld [vmem:[%s180] sm:$0xff]
        %v190 = vld [vmem:[%s180 + $0x8] sm:$0xff]
        %v191 = vld [vmem:[%s180 + $0x10] sm:$0xff]
        %v192 = vld [vmem:[%s180 + $0x18] sm:$0xff]
        %v193 = vld [vmem:[%s180 + $0x20] sm:$0xff]
        %v194 = vld [vmem:[%s180 + $0x28] sm:$0xff]
        %v195 = vld [vmem:[%s180 + $0x30] sm:$0xff]
        %v196 = vld [vmem:[%s180 + $0x38] sm:$0xff]
        %v197 = vld [vmem:[%s180 + $0x40] sm:$0xff]
        %v198 = vld [vmem:[%s180 + $0x48] sm:$0xff]
        %v199 = vld [vmem:[%s180 + $0x50] sm:$0xff]
        %v200 = vld [vmem:[%s180 + $0x58] sm:$0xff]
        %v201 = vld [vmem:[%s180 + $0x60] sm:$0xff]
        %v202 = vld [vmem:[%s180 + $0x68] sm:$0xff]
        %v203 = vld [vmem:[%s180 + $0x70] sm:$0xff]
        %v204 = vld [vmem:[%s180 + $0x78] sm:$0xff]
        %v205 = vld [vmem:[%s180 + $0x80] sm:$0xff]
        %v206 = vld [vmem:[%s180 + $0x88] sm:$0xff]
        %v207 = vld [vmem:[%s180 + $0x90] sm:$0xff]
        %v208 = vld [vmem:[%s180 + $0x98] sm:$0xff]
        %v209 = vld [vmem:[%s180 + $0xa0] sm:$0xff]
        %v210 = vld [vmem:[%s180 + $0xa8] sm:$0xff]
        %v211 = vld [vmem:[%s180 + $0xb0] sm:$0xff]
        %v212 = vld [vmem:[%s180 + $0xb8] sm:$0xff]
        %v213 = vld [vmem:[%s180 + $0xc0] sm:$0xff]
        %v214 = vld [vmem:[%s180 + $0xc8] sm:$0xff]
        %v215 = vld [vmem:[%s180 + $0xd0] sm:$0xff]
        %v216 = vld [vmem:[%s180 + $0xd8] sm:$0xff]
        %v217 = vld [vmem:[%s180 + $0xe0] sm:$0xff]
        %v218 = vld [vmem:[%s180 + $0xe8] sm:$0xff]
        %v219 = vld [vmem:[%s180 + $0xf0] sm:$0xff]
        %v220 = vld [vmem:[%s180 + $0xf8] sm:$0xff]
        %v221 = vld [vmem:[%s1] sm:$0xf]
        %v222 = vld [vmem:[%s1 + $0x4] sm:$0xf]
        %v223 = vld [vmem:[%s1 + $0x8] sm:$0xf]
        %v224 = vld [vmem:[%s1 + $0xc] sm:$0xf]
        %v225 = vld [vmem:[%s1 + $0x10] sm:$0xf]
        %v226 = vld [vmem:[%s1 + $0x14] sm:$0xf]
        %v227 = vld [vmem:[%s1 + $0x18] sm:$0xf]
        %v228 = vld [vmem:[%s1 + $0x1c] sm:$0xf]
        %v229 = vld [vmem:[%s1 + $0x20] sm:$0xf]
        %v230 = vld [vmem:[%s1 + $0x24] sm:$0xf]
        %v231 = vld [vmem:[%s1 + $0x28] sm:$0xf]
        %v232 = vld [vmem:[%s1 + $0x2c] sm:$0xf]
        %v233 = vld [vmem:[%s1 + $0x30] sm:$0xf]
        %v234 = vld [vmem:[%s1 + $0x34] sm:$0xf]
        %v235 = vld [vmem:[%s1 + $0x38] sm:$0xf]
        %v236 = vld [vmem:[%s1 + $0x3c] sm:$0xf]
        %v237 = vld [vmem:[%s1 + $0x40] sm:$0xf]
        %v238 = vld [vmem:[%s1 + $0x44] sm:$0xf]
        %v239 = vld [vmem:[%s1 + $0x48] sm:$0xf]
        %v240 = vld [vmem:[%s1 + $0x4c] sm:$0xf]
        %v241 = vld [vmem:[%s1 + $0x50] sm:$0xf]
        %v242 = vld [vmem:[%s1 + $0x54] sm:$0xf]
        %v243 = vld [vmem:[%s1 + $0x58] sm:$0xf]
        %v244 = vld [vmem:[%s1 + $0x5c] sm:$0xf]
        %v245 = vld [vmem:[%s1 + $0x60] sm:$0xf]
        %v246 = vld [vmem:[%s1 + $0x64] sm:$0xf]
        %v247 = vld [vmem:[%s1 + $0x68] sm:$0xf]
        %v248 = vld [vmem:[%s1 + $0x6c] sm:$0xf]
        %v249 = vld [vmem:[%s1 + $0x70] sm:$0xf]
        %v250 = vld [vmem:[%s1 + $0x74] sm:$0xf]
        %v251 = vld [vmem:[%s1 + $0x78] sm:$0xf]
        %v252 = vld [vmem:[%s1 + $0x7c] sm:$0xf]
        %v253 = vld [vmem:[%s1 + $0x80] sm:$0xf]
        %v254 = vld [vmem:[%s1 + $0x84] sm:$0xf]
        %v255 = vld [vmem:[%s1 + $0x88] sm:$0xf]
        %v256 = vld [vmem:[%s1 + $0x8c] sm:$0xf]
        %v257 = vld [vmem:[%s1 + $0x90] sm:$0xf]
        %v258 = vld [vmem:[%s1 + $0x94] sm:$0xf]
        %v259 = vld [vmem:[%s1 + $0x98] sm:$0xf]
        %v260 = vld [vmem:[%s1 + $0x9c] sm:$0xf]
        %v261 = vld [vmem:[%s1 + $0xa0] sm:$0xf]
        %v262 = vld [vmem:[%s1 + $0xa4] sm:$0xf]
        %v263 = vld [vmem:[%s1 + $0xa8] sm:$0xf]
        %v264 = vld [vmem:[%s1 + $0xac] sm:$0xf]
        %v265 = vld [vmem:[%s1 + $0xb0] sm:$0xf]
        %v266 = vld [vmem:[%s1 + $0xb4] sm:$0xf]
        %v267 = vld [vmem:[%s1 + $0xb8] sm:$0xf]
        %v268 = vld [vmem:[%s1 + $0xbc] sm:$0xf]
        %v269 = vld [vmem:[%s1 + $0xc0] sm:$0xf]
        %v270 = vld [vmem:[%s1 + $0xc4] sm:$0xf]
        %v271 = vld [vmem:[%s1 + $0xc8] sm:$0xf]
        %v272 = vld [vmem:[%s1 + $0xcc] sm:$0xf]
        %v273 = vld [vmem:[%s1 + $0xd0] sm:$0xf]
        %v274 = vld [vmem:[%s1 + $0xd4] sm:$0xf]
        %v307 = vunpack.c.l.b16 %v189
        %v308 = vunpack.c.h.b16 %v189
        %v309 = vunpack.c.l.b16 %v190
        %v310 = vunpack.c.h.b16 %v190
        %v311 = vunpack.c.l.b16 %v191
        %v312 = vunpack.c.h.b16 %v191
        %v313 = vunpack.c.l.b16 %v192
        %v314 = vunpack.c.h.b16 %v192
        %v315 = vunpack.c.l.b16 %v193
        %v316 = vunpack.c.h.b16 %v193
        %v317 = vunpack.c.l.b16 %v194
        %v318 = vunpack.c.h.b16 %v194
        %v319 = vunpack.c.l.b16 %v195
        %v320 = vunpack.c.h.b16 %v195
        %v321 = vunpack.c.l.b16 %v196
        %v322 = vunpack.c.h.b16 %v196
        %v323 = vunpack.c.l.b16 %v197
        %v324 = vunpack.c.h.b16 %v197
        %v325 = vunpack.c.l.b16 %v198
        %v326 = vunpack.c.h.b16 %v198
        %v327 = vunpack.c.l.b16 %v199
        %v328 = vunpack.c.h.b16 %v199
        %v329 = vunpack.c.l.b16 %v200
        %v330 = vunpack.c.h.b16 %v200
        %v331 = vunpack.c.l.b16 %v201
        %v332 = vunpack.c.h.b16 %v201
        %v333 = vunpack.c.l.b16 %v202
        %v334 = vunpack.c.h.b16 %v202
        %v335 = vunpack.c.l.b16 %v203
        %v336 = vunpack.c.h.b16 %v203
        %v337 = vunpack.c.l.b16 %v204
        %v338 = vunpack.c.h.b16 %v204
        %v339 = vunpack.c.l.b16 %v205
        %v340 = vunpack.c.h.b16 %v205
        %v341 = vunpack.c.l.b16 %v206
        %v342 = vunpack.c.h.b16 %v206
        %v343 = vunpack.c.l.b16 %v207
        %v344 = vunpack.c.h.b16 %v207
        %v345 = vunpack.c.l.b16 %v208
        %v346 = vunpack.c.h.b16 %v208
        %v347 = vunpack.c.l.b16 %v209
        %v348 = vunpack.c.h.b16 %v209
        %v349 = vunpack.c.l.b16 %v210
        %v350 = vunpack.c.h.b16 %v210
        %v351 = vunpack.c.l.b16 %v211
        %v352 = vunpack.c.h.b16 %v211
        %v353 = vunpack.c.l.b16 %v212
        %v354 = vunpack.c.h.b16 %v212
        %v355 = vunpack.c.l.b16 %v213
        %v356 = vunpack.c.h.b16 %v213
        %v357 = vunpack.c.l.b16 %v214
        %v358 = vunpack.c.h.b16 %v214
        %v359 = vunpack.c.l.b16 %v215
        %v360 = vunpack.c.h.b16 %v215
        %v361 = vunpack.c.l.b16 %v216
        %v362 = vunpack.c.h.b16 %v216
        %v363 = vunpack.c.l.b16 %v217
        %v364 = vunpack.c.h.b16 %v217
        %v365 = vunpack.c.l.b16 %v218
        %v366 = vunpack.c.h.b16 %v218
        %v367 = vunpack.c.l.b16 %v219
        %v368 = vunpack.c.h.b16 %v219
        %v369 = vunpack.c.l.b16 %v220
        %v370 = vunpack.c.h.b16 %v220
        %v371 = vpack.c.b16 %v311, %v307
        %v372 = vpack.c.b16 %v312, %v308
        %v373 = vpack.c.b16 %v313, %v309
        %v374 = vpack.c.b16 %v314, %v310
        %v375 = vpack.c.b16 %v319, %v315
        %v376 = vpack.c.b16 %v320, %v316
        %v377 = vpack.c.b16 %v321, %v317
        %v378 = vpack.c.b16 %v322, %v318
        %v379 = vpack.c.b16 %v327, %v323
        %v380 = vpack.c.b16 %v328, %v324
        %v381 = vpack.c.b16 %v329, %v325
        %v382 = vpack.c.b16 %v330, %v326
        %v383 = vpack.c.b16 %v335, %v331
        %v384 = vpack.c.b16 %v336, %v332
        %v385 = vpack.c.b16 %v337, %v333
        %v386 = vpack.c.b16 %v338, %v334
        %v387 = vpack.c.b16 %v343, %v339
        %v388 = vpack.c.b16 %v344, %v340
        %v389 = vpack.c.b16 %v345, %v341
        %v390 = vpack.c.b16 %v346, %v342
        %v391 = vpack.c.b16 %v351, %v347
        %v392 = vpack.c.b16 %v352, %v348
        %v393 = vpack.c.b16 %v353, %v349
        %v394 = vpack.c.b16 %v354, %v350
        %v395 = vpack.c.b16 %v359, %v355
        %v396 = vpack.c.b16 %v360, %v356
        %v397 = vpack.c.b16 %v361, %v357
        %v398 = vpack.c.b16 %v362, %v358
        %v399 = vpack.c.b16 %v367, %v363
        %v400 = vpack.c.b16 %v368, %v364
        %v401 = vpack.c.b16 %v369, %v365
        %v402 = vpack.c.b16 %v370, %v366
        %v481 = vunpack.c.l.b16 %v221
        %v482 = vunpack.c.l.b16 %v222
        %v483 = vunpack.c.l.b16 %v223
        %v484 = vunpack.c.l.b16 %v224
        %v485 = vunpack.c.l.b16 %v225
        %v486 = vunpack.c.l.b16 %v226
        %v487 = vunpack.c.l.b16 %v227
        %v488 = vunpack.c.l.b16 %v228
        %v489 = vunpack.c.l.b16 %v229
        %v490 = vunpack.c.l.b16 %v230
        %v491 = vunpack.c.l.b16 %v231
        %v492 = vunpack.c.l.b16 %v232
        %v493 = vunpack.c.l.b16 %v233
        %v494 = vunpack.c.l.b16 %v234
        %v495 = vunpack.c.l.b16 %v235
        %v496 = vunpack.c.l.b16 %v236
        %v497 = vunpack.c.l.b16 %v237
        %v498 = vunpack.c.l.b16 %v238
        %v499 = vunpack.c.l.b16 %v239
        %v500 = vunpack.c.l.b16 %v240
        %v501 = vunpack.c.l.b16 %v241
        %v502 = vunpack.c.l.b16 %v242
        %v503 = vunpack.c.l.b16 %v243
        %v504 = vunpack.c.l.b16 %v244
        %v505 = vunpack.c.l.b16 %v245
        %v506 = vunpack.c.l.b16 %v246
        %v507 = vunpack.c.l.b16 %v247
        %v508 = vunpack.c.l.b16 %v248
        %v509 = vunpack.c.l.b16 %v249
        %v510 = vunpack.c.l.b16 %v250
        %v511 = vunpack.c.l.b16 %v251
        %v512 = vunpack.c.l.b16 %v252
        %v513 = vunpack.c.l.b16 %v253
        %v514 = vunpack.c.l.b16 %v254
        %v515 = vunpack.c.l.b16 %v255
        %v516 = vunpack.c.l.b16 %v256
        %v517 = vunpack.c.l.b16 %v257
        %v518 = vunpack.c.l.b16 %v258
        %v519 = vunpack.c.l.b16 %v259
        %v520 = vunpack.c.l.b16 %v260
        %v521 = vunpack.c.l.b16 %v261
        %v522 = vunpack.c.l.b16 %v262
        %v523 = vunpack.c.l.b16 %v263
        %v524 = vunpack.c.l.b16 %v264
        %v525 = vunpack.c.l.b16 %v265
        %v526 = vunpack.c.l.b16 %v266
        %v527 = vunpack.c.l.b16 %v267
        %v528 = vunpack.c.l.b16 %v268
        %v529 = vunpack.c.l.b16 %v269
        %v530 = vunpack.c.l.b16 %v270
        %v531 = vunpack.c.l.b16 %v271
        %v532 = vunpack.c.l.b16 %v272
        %v533 = vunpack.c.l.b16 %v273
        %v534 = vunpack.c.l.b16 %v274
        %v535 = vpack.c.b16 %v482, %v481
        %v536 = vpack.c.b16 %v484, %v483
        %v537 = vpack.c.b16 %v486, %v485
        %v538 = vpack.c.b16 %v488, %v487
        %v539 = vpack.c.b16 %v490, %v489
        %v540 = vpack.c.b16 %v492, %v491
        %v541 = vpack.c.b16 %v494, %v493
        %v542 = vpack.c.b16 %v496, %v495
        %v543 = vpack.c.b16 %v498, %v497
        %v544 = vpack.c.b16 %v500, %v499
        %v545 = vpack.c.b16 %v502, %v501
        %v546 = vpack.c.b16 %v504, %v503
        %v547 = vpack.c.b16 %v506, %v505
        %v548 = vpack.c.b16 %v508, %v507
        %v549 = vpack.c.b16 %v510, %v509
        %v550 = vpack.c.b16 %v512, %v511
        %v551 = vpack.c.b16 %v514, %v513
        %v552 = vpack.c.b16 %v516, %v515
        %v553 = vpack.c.b16 %v518, %v517
        %v554 = vpack.c.b16 %v520, %v519
        %v555 = vpack.c.b16 %v522, %v521
        %v556 = vpack.c.b16 %v524, %v523
        %v557 = vpack.c.b16 %v526, %v525
        %v558 = vpack.c.b16 %v528, %v527
        %v559 = vpack.c.b16 %v530, %v529
        %v560 = vpack.c.b16 %v532, %v531
        %v561 = vpack.c.b16 %v534, %v533
        %vm589 = vcmask 392192
        %v591 = vsel %vm589, %v374, 0
        %v594 = vsel %vm589, %v378, 0
        %v597 = vsel %vm589, %v382, 0
        %v600 = vsel %vm589, %v386, 0
        %v603 = vsel %vm589, %v390, 0
        %v606 = vsel %vm589, %v394, 0
        %v609 = vsel %vm589, %v398, 0
        %v612 = vsel %vm589, %v402, 0
        %614 = vmatprep.subr.bf16.mxu0 0
        %615 = vmatpush1.bf16.msra.mxu0 %v535
        %616 = vmatprep.subr.bf16.mxu0 0
        %617 = vmatpush1.bf16.msra.mxu0 %v536
        %618 = vmatprep.subr.bf16.mxu0 0
        %619 = vmatpush1.bf16.msra.mxu0 %v537
        %620 = vmatprep.subr.bf16.mxu0 0
        %621 = vmatpush1.bf16.msra.mxu0 %v538
        %622 = vmatprep.subr.bf16.mxu0 0
        %623 = vmatpush1.bf16.msra.mxu0 %v539
        %624 = vmatprep.subr.bf16.mxu0 0
        %625 = vmatpush1.bf16.msra.mxu0 %v540
        %626 = vmatprep.subr.bf16.mxu0 0
        %627 = vmatpush1.bf16.msra.mxu0 %v541
        %628 = vmatprep.subr.bf16.mxu0 0
        %629 = vmatpush1.bf16.msra.mxu0 %v542
        %630 = vmatprep.subr.bf16.mxu0 0
        %631 = vmatpush1.bf16.msra.mxu0 %v543
        %632 = vmatprep.subr.bf16.mxu0 0
        %633 = vmatpush1.bf16.msra.mxu0 %v544
        %634 = vmatprep.subr.bf16.mxu0 0
        %635 = vmatpush1.bf16.msra.mxu0 %v545
        %636 = vmatprep.subr.bf16.mxu0 0
        %637 = vmatpush1.bf16.msra.mxu0 %v546
        %638 = vmatprep.subr.bf16.mxu0 0
        %639 = vmatpush1.bf16.msra.mxu0 %v547
        %640 = vmatprep.subr.bf16.mxu0 0
        %641 = vmatpush1.bf16.msra.mxu0 %v548
        %642 = vmatprep.subr.bf16.mxu0 0
        %643 = vmatpush1.bf16.msra.mxu0 %v549
        %644 = vmatprep.subr.bf16.mxu0 0
        %645 = vmatpush1.bf16.msra.mxu0 %v550
        %646 = vmatprep.mubr.bf16.mxu0 %v372
        %647 = vmatmul.mubr.bf16.gmra.mrb[0].mxu0 %v371
        %v648 = vpop.f32.mrb[0].mxu0
        %v649 = vadd.f32 0.0, %v648
        %v650 = vpop.f32.mrb[0].mxu0
        %v651 = vpop.f32.mrb[0].mxu0
        %v652 = vadd.f32 0.0, %v651
        %v653 = vpop.f32.mrb[0].mxu0
        %654 = vmatprep.mubr.bf16.mxu0 %v376
        %655 = vmatmul.mubr.bf16.gmra.mrb[0].mxu0 %v375
        %v656 = vpop.f32.mrb[0].mxu0
        %v657 = vadd.f32 0.0, %v656
        %v658 = vpop.f32.mrb[0].mxu0
        %v659 = vpop.f32.mrb[0].mxu0
        %v660 = vadd.f32 0.0, %v659
        %v661 = vpop.f32.mrb[0].mxu0
        %662 = vmatprep.mubr.bf16.mxu0 %v380
        %663 = vmatmul.mubr.bf16.gmra.mrb[0].mxu0 %v379
        %v664 = vpop.f32.mrb[0].mxu0
        %v665 = vadd.f32 0.0, %v664
        %v666 = vpop.f32.mrb[0].mxu0
        %v667 = vpop.f32.mrb[0].mxu0
        %v668 = vadd.f32 0.0, %v667
        %v669 = vpop.f32.mrb[0].mxu0
        %670 = vmatprep.mubr.bf16.mxu0 %v384
        %671 = vmatmul.mubr.bf16.gmra.mrb[0].mxu0 %v383
        %v672 = vpop.f32.mrb[0].mxu0
        %v673 = vadd.f32 0.0, %v672
        %v674 = vpop.f32.mrb[0].mxu0
        %v675 = vpop.f32.mrb[0].mxu0
        %v676 = vadd.f32 0.0, %v675
        %v677 = vpop.f32.mrb[0].mxu0
        %678 = vmatprep.mubr.bf16.mxu0 %v388
        %679 = vmatmul.mubr.bf16.gmra.mrb[0].mxu0 %v387
        %v680 = vpop.f32.mrb[0].mxu0
        %v681 = vadd.f32 0.0, %v680
        %v682 = vpop.f32.mrb[0].mxu0
        %v683 = vpop.f32.mrb[0].mxu0
        %v684 = vadd.f32 0.0, %v683
        %v685 = vpop.f32.mrb[0].mxu0
        %686 = vmatprep.mubr.bf16.mxu0 %v392
        %687 = vmatmul.mubr.bf16.gmra.mrb[0].mxu0 %v391
        %v688 = vpop.f32.mrb[0].mxu0
        %v689 = vadd.f32 0.0, %v688
        %v690 = vpop.f32.mrb[0].mxu0
        %v691 = vpop.f32.mrb[0].mxu0
        %v692 = vadd.f32 0.0, %v691
        %v693 = vpop.f32.mrb[0].mxu0
        %694 = vmatprep.mubr.bf16.mxu0 %v396
        %695 = vmatmul.mubr.bf16.gmra.mrb[0].mxu0 %v395
        %v696 = vpop.f32.mrb[0].mxu0
        %v697 = vadd.f32 0.0, %v696
        %v698 = vpop.f32.mrb[0].mxu0
        %v699 = vpop.f32.mrb[0].mxu0
        %v700 = vadd.f32 0.0, %v699
        %v701 = vpop.f32.mrb[0].mxu0
        %702 = vmatprep.mubr.bf16.mxu0 %v400
        %703 = vmatmul.mubr.bf16.gmra.mrb[0].mxu0 %v399
        %v704 = vpop.f32.mrb[0].mxu0
        %v705 = vadd.f32 0.0, %v704
        %v706 = vpop.f32.mrb[0].mxu0
        %v707 = vpop.f32.mrb[0].mxu0
        %v708 = vadd.f32 0.0, %v707
        %v709 = vpop.f32.mrb[0].mxu0
        %710 = vdwg.mxu0
        %711 = vmatprep.subr.bf16.mxu0 0
        %712 = vmatpush1.bf16.msra.mxu0 %v551
        %713 = vmatprep.subr.bf16.mxu0 0
        %714 = vmatpush1.bf16.msra.mxu0 %v552
        %715 = vmatprep.subr.bf16.mxu0 0
        %716 = vmatpush1.bf16.msra.mxu0 %v553
        %717 = vmatprep.subr.bf16.mxu0 0
        %718 = vmatpush1.bf16.msra.mxu0 %v554
        %719 = vmatprep.subr.bf16.mxu0 0
        %720 = vmatpush1.bf16.msra.mxu0 %v555
        %721 = vmatprep.subr.bf16.mxu0 0
        %722 = vmatpush1.bf16.msra.mxu0 %v556
        %723 = vmatprep.subr.bf16.mxu0 0
        %724 = vmatpush1.bf16.msra.mxu0 %v557
        %725 = vmatprep.subr.bf16.mxu0 0
        %726 = vmatpush1.bf16.msra.mxu0 %v558
        %727 = vmatprep.subr.bf16.mxu0 0
        %728 = vmatpush1.bf16.msra.mxu0 %v559
        %729 = vmatprep.subr.bf16.mxu0 0
        %730 = vmatpush1.bf16.msra.mxu0 %v560
        %731 = vmatprep.subr.bf16.mxu0 0
        %732 = vmatpush1.bf16.msra.mxu0 %v561
        %733 = vmatprep.subr.bf16.mxu0 0
        %734 = vmatpush1.bf16.msra.mxu0 0
        %735 = vmatprep.subr.bf16.mxu0 0
        %736 = vmatpush1.bf16.msra.mxu0 0
        %737 = vmatprep.subr.bf16.mxu0 0
        %738 = vmatpush1.bf16.msra.mxu0 0
        %739 = vmatprep.subr.bf16.mxu0 0
        %740 = vmatpush1.bf16.msra.mxu0 0
        %741 = vmatprep.subr.bf16.mxu0 0
        %742 = vmatpush1.bf16.msra.mxu0 0
        %743 = vmatprep.mubr.bf16.mxu0 %v591
        %744 = vmatmul.mubr.bf16.gmra.mrb[0].mxu0 %v373
        %v745 = vpop.f32.mrb[0].mxu0
        %v746 = vadd.f32 %v649, %v745
        %v747 = vpop.f32.mrb[0].mxu0
        %v748 = vpop.f32.mrb[0].mxu0
        %v749 = vadd.f32 %v652, %v748
        %v750 = vpop.f32.mrb[0].mxu0
        %751 = vmatprep.mubr.bf16.mxu0 %v594
        %752 = vmatmul.mubr.bf16.gmra.mrb[0].mxu0 %v377
        %v753 = vpop.f32.mrb[0].mxu0
        %v754 = vadd.f32 %v657, %v753
        %v755 = vpop.f32.mrb[0].mxu0
        %v756 = vpop.f32.mrb[0].mxu0
        %v757 = vadd.f32 %v660, %v756
        %v758 = vpop.f32.mrb[0].mxu0
        %759 = vmatprep.mubr.bf16.mxu0 %v597
        %760 = vmatmul.mubr.bf16.gmra.mrb[0].mxu0 %v381
        %v761 = vpop.f32.mrb[0].mxu0
        %v762 = vadd.f32 %v665, %v761
        %v763 = vpop.f32.mrb[0].mxu0
        %v764 = vpop.f32.mrb[0].mxu0
        %v765 = vadd.f32 %v668, %v764
        %v766 = vpop.f32.mrb[0].mxu0
        %767 = vmatprep.mubr.bf16.mxu0 %v600
        %768 = vmatmul.mubr.bf16.gmra.mrb[0].mxu0 %v385
        %v769 = vpop.f32.mrb[0].mxu0
        %v770 = vadd.f32 %v673, %v769
        %v771 = vpop.f32.mrb[0].mxu0
        %v772 = vpop.f32.mrb[0].mxu0
        %v773 = vadd.f32 %v676, %v772
        %v774 = vpop.f32.mrb[0].mxu0
        %775 = vmatprep.mubr.bf16.mxu0 %v603
        %776 = vmatmul.mubr.bf16.gmra.mrb[0].mxu0 %v389
        %v777 = vpop.f32.mrb[0].mxu0
        %v778 = vadd.f32 %v681, %v777
        %v779 = vpop.f32.mrb[0].mxu0
        %v780 = vpop.f32.mrb[0].mxu0
        %v781 = vadd.f32 %v684, %v780
        %v782 = vpop.f32.mrb[0].mxu0
        %783 = vmatprep.mubr.bf16.mxu0 %v606
        %784 = vmatmul.mubr.bf16.gmra.mrb[0].mxu0 %v393
        %v785 = vpop.f32.mrb[0].mxu0
        %v786 = vadd.f32 %v689, %v785
        %v787 = vpop.f32.mrb[0].mxu0
        %v788 = vpop.f32.mrb[0].mxu0
        %v789 = vadd.f32 %v692, %v788
        %v790 = vpop.f32.mrb[0].mxu0
        %791 = vmatprep.mubr.bf16.mxu0 %v609
        %792 = vmatmul.mubr.bf16.gmra.mrb[0].mxu0 %v397
        %v793 = vpop.f32.mrb[0].mxu0
        %v794 = vadd.f32 %v697, %v793
        %v795 = vpop.f32.mrb[0].mxu0
        %v796 = vpop.f32.mrb[0].mxu0
        %v797 = vadd.f32 %v700, %v796
        %v798 = vpop.f32.mrb[0].mxu0
        %799 = vmatprep.mubr.bf16.mxu0 %v612
        %800 = vmatmul.mubr.bf16.gmra.mrb[0].mxu0 %v401
        %v801 = vpop.f32.mrb[0].mxu0
        %v802 = vadd.f32 %v705, %v801
        %v803 = vpop.f32.mrb[0].mxu0
        %v804 = vpop.f32.mrb[0].mxu0
        %v805 = vadd.f32 %v708, %v804
        %v806 = vpop.f32.mrb[0].mxu0
        %807 = vdwg.mxu0
        %v808 = vpack.c.bf16 %v749, %v746
        %v809 = vpack.c.bf16 %v757, %v754
        %v810 = vpack.c.bf16 %v765, %v762
        %v811 = vpack.c.bf16 %v773, %v770
        %v812 = vpack.c.bf16 %v781, %v778
        %v813 = vpack.c.bf16 %v789, %v786
        %v814 = vpack.c.bf16 %v797, %v794
        %v815 = vpack.c.bf16 %v805, %v802
        %v824 = vunpack.c.l.b16 %v808
        %v825 = vunpack.c.h.b16 %v808
        %v826 = vunpack.c.l.b16 %v809
        %v827 = vunpack.c.h.b16 %v809
        %v828 = vunpack.c.l.b16 %v810
        %v829 = vunpack.c.h.b16 %v810
        %v830 = vunpack.c.l.b16 %v811
        %v831 = vunpack.c.h.b16 %v811
        %v832 = vunpack.c.l.b16 %v812
        %v833 = vunpack.c.h.b16 %v812
        %v834 = vunpack.c.l.b16 %v813
        %v835 = vunpack.c.h.b16 %v813
        %v836 = vunpack.c.l.b16 %v814
        %v837 = vunpack.c.h.b16 %v814
        %v838 = vunpack.c.l.b16 %v815
        %v839 = vunpack.c.h.b16 %v815
        %v840 = vpack.c.b16 %v824, %v824
        %v841 = vpack.c.b16 %v825, %v825
        %v842 = vpack.c.b16 %v826, %v826
        %v843 = vpack.c.b16 %v827, %v827
        %v844 = vpack.c.b16 %v828, %v828
        %v845 = vpack.c.b16 %v829, %v829
        %v846 = vpack.c.b16 %v830, %v830
        %v847 = vpack.c.b16 %v831, %v831
        %v848 = vpack.c.b16 %v832, %v832
        %v849 = vpack.c.b16 %v833, %v833
        %v850 = vpack.c.b16 %v834, %v834
        %v851 = vpack.c.b16 %v835, %v835
        %v852 = vpack.c.b16 %v836, %v836
        %v853 = vpack.c.b16 %v837, %v837
        %v854 = vpack.c.b16 %v838, %v838
        %v855 = vpack.c.b16 %v839, %v839
        %vm872 = vcmask 257024
        %873 = vst.msk [vmem:[%s186] sm:$0xf] %vm872, %v840
        %874 = vst.msk [vmem:[%s186 + $0x4] sm:$0xf] %vm872, %v841
        %875 = vst.msk [vmem:[%s186 + $0x8] sm:$0xf] %vm872, %v842
        %876 = vst.msk [vmem:[%s186 + $0xc] sm:$0xf] %vm872, %v843
        %877 = vst.msk [vmem:[%s186 + $0x10] sm:$0xf] %vm872, %v844
        %878 = vst.msk [vmem:[%s186 + $0x14] sm:$0xf] %vm872, %v845
        %879 = vst.msk [vmem:[%s186 + $0x18] sm:$0xf] %vm872, %v846
        %880 = vst.msk [vmem:[%s186 + $0x1c] sm:$0xf] %vm872, %v847
        %881 = vst.msk [vmem:[%s186 + $0x20] sm:$0xf] %vm872, %v848
        %882 = vst.msk [vmem:[%s186 + $0x24] sm:$0xf] %vm872, %v849
        %883 = vst.msk [vmem:[%s186 + $0x28] sm:$0xf] %vm872, %v850
        %884 = vst.msk [vmem:[%s186 + $0x2c] sm:$0xf] %vm872, %v851
        %885 = vst.msk [vmem:[%s186 + $0x30] sm:$0xf] %vm872, %v852
        %886 = vst.msk [vmem:[%s186 + $0x34] sm:$0xf] %vm872, %v853
        %887 = vst.msk [vmem:[%s186 + $0x38] sm:$0xf] %vm872, %v854
        %888 = vst.msk [vmem:[%s186 + $0x3c] sm:$0xf] %vm872, %v855
        %v889 = vadd.f32 %v746, %v749
        %v890 = vadd.f32 %v889, %v754
        %v891 = vadd.f32 %v890, %v757
        %v892 = vadd.f32 %v891, %v762
        %v893 = vadd.f32 %v892, %v765
        %v894 = vadd.f32 %v893, %v770
        %v895 = vadd.f32 %v894, %v773
        %v896 = vadd.f32 %v895, %v778
        %v897 = vadd.f32 %v896, %v781
        %v898 = vadd.f32 %v897, %v786
        %v899 = vadd.f32 %v898, %v789
        %v900 = vadd.f32 %v899, %v794
        %v901 = vadd.f32 %v900, %v797
        %v902 = vadd.f32 %v901, %v802
        %v903 = vadd.f32 %v902, %v805
        %v904 = vrot.slane %v903, 4
        %v905 = vadd.f32 %v903, %v904
        %v906 = vrot.slane %v905, 2
        %v907 = vadd.f32 %v905, %v906
        %v908 = vrot.slane %v907, 1
        %v909 = vadd.f32 %v907, %v908
        %910 = vst [vmem:[%s174] sm:$0x1] %v909
        %v911 = vmul.f32 %v746, %v746
        %v912 = vmul.f32 %v749, %v749
        %v913 = vmul.f32 %v754, %v754
        %v914 = vmul.f32 %v757, %v757
        %v915 = vmul.f32 %v762, %v762
        %v916 = vmul.f32 %v765, %v765
        %v917 = vmul.f32 %v770, %v770
        %v918 = vmul.f32 %v773, %v773
        %v919 = vmul.f32 %v778, %v778
        %v920 = vmul.f32 %v781, %v781
        %v921 = vmul.f32 %v786, %v786
        %v922 = vmul.f32 %v789, %v789
        %v923 = vmul.f32 %v794, %v794
        %v924 = vmul.f32 %v797, %v797
        %v925 = vmul.f32 %v802, %v802
        %v926 = vmul.f32 %v805, %v805
        %v927 = vadd.f32 %v911, %v912
        %v928 = vadd.f32 %v927, %v913
        %v929 = vadd.f32 %v928, %v914
        %v930 = vadd.f32 %v929, %v915
        %v931 = vadd.f32 %v930, %v916
        %v932 = vadd.f32 %v931, %v917
        %v933 = vadd.f32 %v932, %v918
        %v934 = vadd.f32 %v933, %v919
        %v935 = vadd.f32 %v934, %v920
        %v936 = vadd.f32 %v935, %v921
        %v937 = vadd.f32 %v936, %v922
        %v938 = vadd.f32 %v937, %v923
        %v939 = vadd.f32 %v938, %v924
        %v940 = vadd.f32 %v939, %v925
        %v941 = vadd.f32 %v940, %v926
        %v942 = vrot.slane %v941, 4
        %v943 = vadd.f32 %v941, %v942
        %v944 = vrot.slane %v943, 2
        %v945 = vadd.f32 %v943, %v944
        %v946 = vrot.slane %v945, 1
        %v947 = vadd.f32 %v945, %v946
        %948 = vst [vmem:[%s174 + $0x1] sm:$0x1] %v947
        %s949 = smul.u32 16, %s18
        %p950 = scmp.lt.s32.totalorder %s949, 31
        %s951 = scalar_select %p950, %s949, 31
        %s952 = smul.addr %s951, 4
        %s953 = scalar_lea.vmem %s2, %s952
        %s954 = sand.u32 %s99, 1
        %s955 = scalar_lea.sflag [#allocation3], %s954
        %s956 = sand.u32 %s99, 1
        %s957 = smul.addr %s956, 2
        %s958 = scalar_lea.vmem [#allocation2], %s957
        // Predicated region
        $region29: #{tpu_custom_call.1} parent=27 // pred_check
          %p959 = pneg %p83
        $region30: #{tpu_custom_call.1} parent=27 // pred_check_branch
          %961 = sbr.rel (%p959) target = $region32
        $region31: #{tpu_custom_call.1} parent=27 // pred_region
          %s962 = smul.u32 16, %s18
        $region32: #{tpu_custom_call.1} parent=27 // pred_fallthru
          _
        // Predicated region
        $region33: #{tpu_custom_call.1} parent=27 // pred_check
          %p963 = pneg %p109
        $region34: #{tpu_custom_call.1} parent=27 // pred_check_branch
          %965 = sbr.rel (%p963) target = $region36
        $region35: #{tpu_custom_call.1} parent=27 // pred_region
          %s967 = ssub.s32 32, 32
          %968 = vsyncadd %s955, %s967
          %s969 = smul.addr %s18, 32
          %s970 = scalar_lea.hbm %s3, %s969
          %s972 = sshll.u32 %s958, 4
          %s973 = int_to_ptr.vmem [resolvable:$true] %s972
          %975 = dma.vmem_to_hbm [thread:$0]  %s973, 32, %s970, %s955
        $region36: #{tpu_custom_call.1} parent=27 // pred_fallthru
          _
      $region28: #{tpu_custom_call.1} parent=5 // pred_fallthru
        _
      %p976 = scmp.le.s32.totalorder 2, %s13
      // Predicated region
      $region37: #{tpu_custom_call.1} parent=5 // pred_check
        %p977 = pneg %p976
      $region38: #{tpu_custom_call.1} parent=5 // pred_check_branch
        %979 = sbr.rel (%p977) target = $region40
      $region39: #{tpu_custom_call.1} parent=5 // pred_region
        %s980 = ssub.s32 %s13, 2
        // Predicated region
        $region41: #{tpu_custom_call.1} parent=39 // pred_check
          %p981 = pneg %p89
        $region42: #{tpu_custom_call.1} parent=39 // pred_check_branch
          %983 = sbr.rel (%p981) target = $region44
        $region43: #{tpu_custom_call.1} parent=39 // pred_region
          %s984 = smul.u32 16, %s19
          %p985 = scmp.lt.s32.totalorder %s984, 31
          %s986 = scalar_select %p985, %s984, 31
          %s987 = smul.addr %s986, 4
          %s988 = scalar_lea.vmem %s2, %s987
        $region44: #{tpu_custom_call.1} parent=39 // pred_fallthru
          _
        // Predicated region
        $region45: #{tpu_custom_call.1} parent=39 // pred_check
          %p989 = pneg %p115
        $region46: #{tpu_custom_call.1} parent=39 // pred_check_branch
          %991 = sbr.rel (%p989) target = $region48
        $region47: #{tpu_custom_call.1} parent=39 // pred_region
          %s992 = sand.u32 %s100, 1
          %s993 = scalar_lea.sflag [#allocation3], %s992
          %s994 = sand.u32 %s100, 1
          %s995 = smul.addr %s994, 2
          %s996 = scalar_lea.vmem [#allocation2], %s995
          %997 = dma.done %s993, 32
        $region48: #{tpu_custom_call.1} parent=39 // pred_fallthru
          _
      $region40: #{tpu_custom_call.1} parent=5 // pred_fallthru
        _
    $region6: #{tpu_custom_call.1} parent=1 // loop_footer
      %s17 = sadd.s32 1, %s13
    $region7: #{tpu_custom_call.1} parent=1 // loop_footer_branch
      %12 = sbr.rel target = $region3
    $region8: #{tpu_custom_call.1} parent=1 // loop_exit
      _
    %998 = vsyncpa [#allocation3], 1
    %s999 = scalar_lea.sflag [#allocation3], 1
    %1000 = vsyncpa %s999, 1

</llo_original>
